<compile_context>
chip_gen: v7x
topology: tpu7x:2x2x1
jax: 0.10.0
libtpu: 0.0.40
codegen_flags: <defaults>
</compile_context>

<pallas_src>
import functools

import jax
import jax.numpy as jnp
from jax.experimental import pallas as pl
from jax.experimental.pallas import tpu as pltpu


def _pick_tile(dim, target):
    """Use `target` when it divides `dim`, else fall back to the full extent
    (always a legal block shape)."""
    target = min(dim, target)
    return target if dim % target == 0 else dim


# ----------------------------------------------------------------------------
# Kernel 1: sectioned dense layer   out[s] = x @ w[s] + b[s]
#   grid = (S, M/tm, Nout/tn, K/tk), f32 accumulator over the K axis.
# ----------------------------------------------------------------------------
def _proj_kernel(x_ref, w_ref, b_ref, o_ref, acc_ref):
    @pl.when(pl.program_id(3) == 0)
    def _():
        acc_ref[...] = jnp.zeros_like(acc_ref)

    acc_ref[...] += jnp.dot(x_ref[...], w_ref[0],
                            preferred_element_type=jnp.float32)

    @pl.when(pl.program_id(3) == pl.num_programs(3) - 1)
    def _():
        o_ref[0] = (acc_ref[...] + b_ref[0]).astype(o_ref.dtype)


def pallas_linear(x2d, w, b, *, tm=256, tn=256, tk=512):
    """x2d: (M, K); w: (S, K, Nout); b: (S, 1, Nout) -> (S, M, Nout)."""
    M, K = x2d.shape
    S, K2, Nout = w.shape
    assert K == K2 and b.shape == (S, 1, Nout)
    tm = _pick_tile(M, tm)
    tn = _pick_tile(Nout, tn)
    tk = _pick_tile(K, tk)
    return pl.pallas_call(
        _proj_kernel,
        out_shape=jax.ShapeDtypeStruct((S, M, Nout), jnp.float32),
        grid=(S, M // tm, Nout // tn, K // tk),
        in_specs=[
            pl.BlockSpec((tm, tk), lambda s, i, j, k: (i, k)),
            pl.BlockSpec((1, tk, tn), lambda s, i, j, k: (s, k, j)),
            pl.BlockSpec((1, 1, tn), lambda s, i, j, k: (s, 0, j)),
        ],
        out_specs=pl.BlockSpec((1, tm, tn), lambda s, i, j, k: (s, i, j)),
        scratch_shapes=[pltpu.VMEM((tm, tn), jnp.float32)],
        compiler_params=pltpu.CompilerParams(
            dimension_semantics=("parallel", "parallel", "parallel",
                                 "arbitrary")),
    )(x2d, w, b)


# ----------------------------------------------------------------------------
# Kernel 2: joint space-time attention with optional policy-masked softmax.
#   Flash-style: grid (B, q_tiles, kv_tiles); online softmax state in scratch.
#   Exact reference semantics:
#     - row max is taken over the raw (unmasked) scores,
#     - attn_policy[i, j] = 1 on the diagonal, policy[j] elsewhere,
#     - (exp + eps/N) / (rowsum(exp*policy) + eps)  ==  folded via colsum(v).
# ----------------------------------------------------------------------------
def _attn_kernel(q_ref, k_ref, v_ref, pol_ref, o_ref,
                 m_ref, l_ref, acc_ref, vsum_ref,
                 *, num_heads, head_dim, scale, eps, n_tokens,
                 q_tile, kv_tile, has_policy):
    qi = pl.program_id(1)
    ki = pl.program_id(2)

    @pl.when(ki == 0)
    def _():
        m_ref[...] = jnp.full_like(m_ref, -jnp.inf)
        l_ref[...] = jnp.zeros_like(l_ref)
        acc_ref[...] = jnp.zeros_like(acc_ref)
        vsum_ref[...] = jnp.zeros_like(vsum_ref)

    qb = q_ref[0, 0]          # (tq, C)
    kb = k_ref[0, 0]          # (tk, C)
    vb = v_ref[0, 0]          # (tk, C)

    if has_policy:
        # attn_policy built lazily per (q_tile, kv_tile) block: 1 on the global
        # diagonal, policy[col] elsewhere.  No N x N eye is materialised.
        row_g = qi * q_tile + jax.lax.broadcasted_iota(
            jnp.int32, (q_tile, kv_tile), 0)
        col_g = ki * kv_tile + jax.lax.broadcasted_iota(
            jnp.int32, (q_tile, kv_tile), 1)
        keep = jnp.where(row_g == col_g, 1.0, pol_ref[0])     # (tq, tk)
        # running column-sum of v over ALL tokens, for the eps/N term.
        vsum_ref[...] += jnp.sum(vb, axis=0, keepdims=True)   # (1, C)

    d = head_dim
    for h in range(num_heads):
        qh = qb[:, h * d:(h + 1) * d]      # (tq, d)
        kh = kb[:, h * d:(h + 1) * d]      # (tk, d)
        vh = vb[:, h * d:(h + 1) * d]      # (tk, d)

        s = jax.lax.dot_general(
            qh, kh, (((1,), (1,)), ((), ())),
            preferred_element_type=jnp.float32) * scale       # (tq, tk)

        m_old = m_ref[h]                                       # (tq, 1)
        # NOTE: matches PyTorch exactly -- max over unmasked scores, policy
        # multiply only after the exp.
        m_new = jnp.maximum(m_old, jnp.max(s, axis=-1, keepdims=True))
        alpha = jnp.exp(m_old - m_new)
        p = jnp.exp(s - m_new)
        if has_policy:
            p = p * keep
        l_ref[h] = alpha * l_ref[h] + jnp.sum(p, axis=-1, keepdims=True)
        acc_ref[h] = alpha * acc_ref[h] + jnp.dot(
            p, vh, preferred_element_type=jnp.float32)
        m_ref[h] = m_new

    @pl.when(ki == pl.num_programs(2) - 1)
    def _():
        vs = vsum_ref[...]                                     # (1, C)
        outs = []
        for h in range(num_heads):
            if has_policy:
                num = acc_ref[h] + (eps / n_tokens) * vs[:, h * d:(h + 1) * d]
                inv = 1.0 / (l_ref[h] + eps)
            else:
                num = acc_ref[h]
                inv = 1.0 / l_ref[h]
            outs.append(num * inv)
        # one lane-dense (tq, C) store straight into the (B, N, C) output slab
        o_ref[0] = jnp.concatenate(outs, axis=-1).astype(o_ref.dtype)


def pallas_joint_attention(qkv, policy, *, num_heads, scale, eps=1e-6,
                           q_tile=256, kv_tile=512):
    """qkv: (3, B, N, C) slab; policy: (B, N, 1) or None -> (B, N, C)."""
    S, B, N, C = qkv.shape
    assert S == 3
    d = C // num_heads
    has_policy = policy is not None
    if has_policy:
        pol = policy.reshape(B, 1, N).astype(jnp.float32)
    else:
        pol = jnp.ones((B, 1, N), jnp.float32)   # passed but unused by the math

    tq = _pick_tile(N, q_tile)
    tk = _pick_tile(N, kv_tile)

    kern = functools.partial(
        _attn_kernel, num_heads=num_heads, head_dim=d, scale=scale, eps=eps,
        n_tokens=N, q_tile=tq, kv_tile=tk, has_policy=has_policy)

    return pl.pallas_call(
        kern,
        out_shape=jax.ShapeDtypeStruct((B, N, C), jnp.float32),
        grid=(B, N // tq, N // tk),
        in_specs=[
            pl.BlockSpec((1, 1, tq, C), lambda b, q, k: (0, b, q, 0)),   # q
            pl.BlockSpec((1, 1, tk, C), lambda b, q, k: (1, b, k, 0)),   # k
            pl.BlockSpec((1, 1, tk, C), lambda b, q, k: (2, b, k, 0)),   # v
            pl.BlockSpec((1, 1, tk), lambda b, q, k: (b, 0, k)),         # policy
        ],
        out_specs=pl.BlockSpec((1, tq, C), lambda b, q, k: (b, q, 0)),
        scratch_shapes=[
            pltpu.VMEM((num_heads, tq, 1), jnp.float32),   # running row max
            pltpu.VMEM((num_heads, tq, 1), jnp.float32),   # running row sum
            pltpu.VMEM((num_heads, tq, d), jnp.float32),   # per-head output acc
            pltpu.VMEM((1, C), jnp.float32),               # running colsum(v)
        ],
        compiler_params=pltpu.CompilerParams(
            dimension_semantics=("parallel", "parallel", "arbitrary")),
    )(qkv, qkv, qkv, pol)


# ----------------------------------------------------------------------------
# Module-equivalent forward
# ----------------------------------------------------------------------------
def joint_space_time_attention(x, policy, params, num_heads, eps=1e-6):
    """x: (B, N, C); policy: (B, N, 1) or None; params: dict of weights."""
    B, N, C = x.shape
    head_dim = C // num_heads
    scale = head_dim ** (-0.5)

    x2d = x.reshape(B * N, C)

    # qkv projection, emitted directly as a (3, B, N, C) slab so the attention
    # kernel indexes q/k/v via BlockSpecs (no activation transposes in XLA).
    w_qkv = params["w_qkv"].reshape(C, 3, C).transpose(1, 0, 2)     # (3, C, C)
    b_qkv = params["b_qkv"].reshape(3, 1, C)
    qkv = pallas_linear(x2d, w_qkv, b_qkv).reshape(3, B, N, C)

    out = pallas_joint_attention(qkv, policy, num_heads=num_heads,
                                 scale=scale, eps=eps)              # (B, N, C)

    # output projection. attn_drop / proj_drop are identity (p = 0.0).
    w_proj = params["w_proj"].reshape(1, C, C)
    b_proj = params["b_proj"].reshape(1, 1, C)
    y = pallas_linear(out.reshape(B * N, C), w_proj, b_proj)        # (1, B*N, C)
    return y.reshape(B, N, C)


# ----------------------------------------------------------------------------
# Pure-JAX reference (mirrors the PyTorch forward) for verification
# ----------------------------------------------------------------------------
def ref_forward(x, policy, params, num_heads, eps=1e-6):
    B, N, C = x.shape
    head_dim = C // num_heads
    scale = head_dim ** (-0.5)
    qkv = x.reshape(B * N, C) @ params["w_qkv"] + params["b_qkv"]
    qkv = qkv.reshape(B, N, 3, num_heads, head_dim).transpose(2, 0, 3, 1, 4)
    q, k, v = qkv[0], qkv[1], qkv[2]
    attn = jnp.einsum("bhnd,bhmd->bhnm", q, k) * scale
    if policy is None:
        attn = jax.nn.softmax(attn, axis=-1)
    else:
        pol = policy.reshape(B, 1, 1, N).astype(jnp.float32)
        eye = jnp.eye(N, dtype=jnp.float32)[None, None]
        attn_policy = pol + (1.0 - pol) * eye
        max_att = jnp.max(attn, axis=-1, keepdims=True)
        attn = jnp.exp(attn - max_att) * attn_policy
        attn = (attn + eps / N) / (jnp.sum(attn, axis=-1, keepdims=True) + eps)
    out = jnp.einsum("bhnm,bhmd->bhnd", attn, v)
    out = out.transpose(0, 2, 1, 3).reshape(B * N, C)
    return (out @ params["w_proj"] + params["b_proj"]).reshape(B, N, C)


if __name__ == "__main__":
    B, N, C, H = 2, 16, 32, 4

    key = jax.random.PRNGKey(0)
    k_x, k_pol, k_wqkv, k_wproj, k_bproj = jax.random.split(key, 5)

    x = jax.random.normal(k_x, (B, N, C), jnp.float32)
    # token keep/drop policy in {0, 1}
    policy = (jax.random.uniform(k_pol, (B, N, 1)) > 0.3).astype(jnp.float32)

    # nn.Linear-equivalent parameters, stored as (in, out)
    params = {
        "w_qkv": 0.02 * jax.random.normal(k_wqkv, (C, 3 * C), jnp.float32),
        "b_qkv": jnp.zeros((3 * C,), jnp.float32),          # qkv_bias=False
        "w_proj": 0.02 * jax.random.normal(k_wproj, (C, C), jnp.float32),
        "b_proj": 0.01 * jax.random.normal(k_bproj, (C,), jnp.float32),
    }

    # policy-masked softmax path
    y = jax.block_until_ready(
        joint_space_time_attention(x, policy, params, num_heads=H))
    y_ref = ref_forward(x, policy, params, num_heads=H)
    assert y.shape == (B, N, C)
    assert jnp.allclose(y, y_ref, atol=1e-4, rtol=1e-4), "policy path mismatch"

    # policy=None path (plain softmax)
    y2 = jax.block_until_ready(
        joint_space_time_attention(x, None, params, num_heads=H))
    y2_ref = ref_forward(x, None, params, num_heads=H)
    assert jnp.allclose(y2, y2_ref, atol=1e-4, rtol=1e-4), "softmax path mismatch"

    print("KERNEL_OK")
</pallas_src>

<mosaic_0001>
module attributes {stable_mosaic.version = 11 : i64} {
  func.func @_proj_kernel(%arg0: i32, %arg1: i32, %arg2: i32, %arg3: i32, %arg4: memref<32x32xf32, #tpu.memory_space<vmem>>, %arg5: memref<1x32x32xf32, #tpu.memory_space<vmem>>, %arg6: memref<1x1x32xf32, #tpu.memory_space<vmem>>, %arg7: memref<1x32x32xf32, #tpu.memory_space<vmem>>, %arg8: memref<32x32xf32, #tpu.memory_space<vmem>>) attributes {dimension_semantics = [#tpu.dimension_semantics<parallel>, #tpu.dimension_semantics<parallel>, #tpu.dimension_semantics<parallel>, #tpu.dimension_semantics<arbitrary>], iteration_bounds = array<i64: 3, 1, 1, 1>, scalar_prefetch = 0 : i64, scratch_operands = 1 : i64, tpu.core_type = #tpu.core_type<tc>, window_params = [{transform_indices = @transform_0, window_bounds = array<i64: 32, 32>}, {transform_indices = @transform_1, window_bounds = array<i64: 1, 32, 32>}, {transform_indices = @transform_2, window_bounds = array<i64: 1, 1, 32>}, {transform_indices = @transform_3, window_bounds = array<i64: 1, 32, 32>}]} {
    %c0_i32 = arith.constant 0 : i32
    %0 = arith.cmpi eq, %arg3, %c0_i32 : i32
    %1 = arith.extui %0 : i1 to i32
    %c0_i32_0 = arith.constant 0 : i32
    %2 = arith.cmpi ne, %1, %c0_i32_0 : i32
    scf.if %2 {
      %cst_11 = arith.constant 0.000000e+00 : f32
      %13 = vector.broadcast %cst_11 : f32 to vector<32x32xf32>
      %c0_12 = arith.constant 0 : index
      %c0_13 = arith.constant 0 : index
      %14 = vector.load %arg8[%c0_12, %c0_13] : memref<32x32xf32, #tpu.memory_space<vmem>>, vector<32x32xf32>
      tpu.vector_store %arg8[%c0_12, %c0_13], %13 {strides = array<i32>} : memref<32x32xf32, #tpu.memory_space<vmem>>, vector<32x32xf32>,
    } else {
    }
    %c0 = arith.constant 0 : index
    %c0_1 = arith.constant 0 : index
    %3 = vector.load %arg8[%c0, %c0_1] : memref<32x32xf32, #tpu.memory_space<vmem>>, vector<32x32xf32>
    %c0_2 = arith.constant 0 : index
    %c0_3 = arith.constant 0 : index
    %4 = vector.load %arg4[%c0_2, %c0_3] : memref<32x32xf32, #tpu.memory_space<vmem>>, vector<32x32xf32>
    %c0_4 = arith.constant 0 : index
    %c0_5 = arith.constant 0 : index
    %c0_6 = arith.constant 0 : index
    %5 = vector.load %arg5[%c0_4, %c0_5, %c0_6] : memref<1x32x32xf32, #tpu.memory_space<vmem>>, vector<1x32x32xf32>
    %6 = vector.shape_cast %5 : vector<1x32x32xf32> to vector<32x32xf32>
    %cst = arith.constant dense<0.000000e+00> : vector<32x32xf32>
    %7 = tpu.matmul %4, %6, %cst {dimension_numbers = #tpu.dot_dimension_numbers<[1], [0], [0], [1], [0, 0, 1, 1], [], []>} : vector<32x32xf32>, vector<32x32xf32>, vector<32x32xf32> -> vector<32x32xf32>
    %8 = arith.addf %3, %7 : vector<32x32xf32>
    %c0_7 = arith.constant 0 : index
    %c0_8 = arith.constant 0 : index
    %9 = vector.load %arg8[%c0_7, %c0_8] : memref<32x32xf32, #tpu.memory_space<vmem>>, vector<32x32xf32>
    tpu.vector_store %arg8[%c0_7, %c0_8], %8 {strides = array<i32>} : memref<32x32xf32, #tpu.memory_space<vmem>>, vector<32x32xf32>,
    %c0_i32_9 = arith.constant 0 : i32
    %10 = arith.cmpi eq, %arg3, %c0_i32_9 : i32
    %11 = arith.extui %10 : i1 to i32
    %c0_i32_10 = arith.constant 0 : i32
    %12 = arith.cmpi ne, %11, %c0_i32_10 : i32
    scf.if %12 {
      %c0_11 = arith.constant 0 : index
      %c0_12 = arith.constant 0 : index
      %13 = vector.load %arg8[%c0_11, %c0_12] : memref<32x32xf32, #tpu.memory_space<vmem>>, vector<32x32xf32>
      %c0_13 = arith.constant 0 : index
      %c0_14 = arith.constant 0 : index
      %c0_15 = arith.constant 0 : index
      %14 = vector.load %arg6[%c0_13, %c0_14, %c0_15] : memref<1x1x32xf32, #tpu.memory_space<vmem>>, vector<1x1x32xf32>
      %15 = vector.shape_cast %14 : vector<1x1x32xf32> to vector<1x32xf32>
      %16 = vector.broadcast %15 : vector<1x32xf32> to vector<32x32xf32>
      %17 = arith.addf %13, %16 : vector<32x32xf32>
      %c0_16 = arith.constant 0 : index
      %c0_17 = arith.constant 0 : index
      %c0_18 = arith.constant 0 : index
      %18 = vector.load %arg7[%c0_16, %c0_17, %c0_18] : memref<1x32x32xf32, #tpu.memory_space<vmem>>, vector<1x32x32xf32>
      %19 = vector.shape_cast %18 : vector<1x32x32xf32> to vector<32x32xf32>
      %20 = vector.shape_cast %17 : vector<32x32xf32> to vector<1x32x32xf32>
      tpu.vector_store %arg7[%c0_16, %c0_17, %c0_18], %20 {strides = array<i32>} : memref<1x32x32xf32, #tpu.memory_space<vmem>>, vector<1x32x32xf32>,
    } else {
    }
    return
  }
  func.func @transform_0(%arg0: i32, %arg1: i32, %arg2: i32, %arg3: i32) -> (i32, i32) {
    %c0_i32 = arith.constant 0 : i32
    return %arg1, %arg3 : i32, i32
  }
  func.func @transform_1(%arg0: i32, %arg1: i32, %arg2: i32, %arg3: i32) -> (i32, i32, i32) {
    %c0_i32 = arith.constant 0 : i32
    return %arg0, %arg3, %arg2 : i32, i32, i32
  }
  func.func @transform_2(%arg0: i32, %arg1: i32, %arg2: i32, %arg3: i32) -> (i32, i32, i32) {
    %c0_i32 = arith.constant 0 : i32
    %c0_i32_0 = arith.constant 0 : i32
    return %arg0, %c0_i32, %arg2 : i32, i32, i32
  }
  func.func @transform_3(%arg0: i32, %arg1: i32, %arg2: i32, %arg3: i32) -> (i32, i32, i32) {
    %c0_i32 = arith.constant 0 : i32
    return %arg0, %arg1, %arg2 : i32, i32, i32
  }
}

</mosaic_0001>

<llo_original>
// kernel: tpu_custom_call.1
$region0: #{tpu_custom_call.1}
  #allocation0 [shape = 'u32[]', space=smem, size = 0x4, offset = 0x4, fixed_abs, tag = 'smem constant byte address 0x4 - core index']
  #allocation1 [shape = 'u32[144,128]{1,0:T(1,128)}', space=vmem, size = 0x12000, scoped, tag = 'internal scratch']
  #allocation2 [shape = 'f32[32,32]{1,0:T(8,128)}', space=vmem, size = 0x4000, scoped, tag = 'scratch operand']
  %s0 = inlined_call_operand.hbm [shape: f32[32,32], index: 0, kind: input, shape index: {}]
  %s1 = inlined_call_operand.hbm [shape: f32[3,32,32], index: 1, kind: input, shape index: {}]
  %s2 = inlined_call_operand.vmem [shape: f32[3,1,32], index: 2, kind: input, shape index: {}]
  %s3 = inlined_call_operand.hbm [shape: f32[3,32,32], index: 3, kind: output, shape index: {}]
  %s4 = sld [smem:[#allocation0]]
  $region61: #{tpu_custom_call.1} parent=0
    _
  %s6 = ssub.s32 1, %s4
  %s7 = scalar_select 0, %s6, %s4
  $region1: #{tpu_custom_call.1} parent=0
    #allocation3 [shape = 'u8[16384]{0}', space=vmem, size = 0x4000, scoped, tag = 'input window, operand 0, single buffered']
    #allocation4 [shape = 's32[2]{0}', space=sflag, size = 0x8, scoped, tag = 'scoped memory for tpu_custom_call.1']
    #allocation5 [shape = 's32[2]{0}', space=sflag, size = 0x8, scoped, tag = 'scoped memory for tpu_custom_call.1']
    #allocation6 [shape = 'u8[32768]{0}', space=vmem, size = 0x8000, scoped, tag = 'input window, operand 1']
    #allocation7 [shape = 's32[2]{0}', space=sflag, size = 0x8, scoped, tag = 'scoped memory for tpu_custom_call.1']
    #allocation8 [shape = 'u8[32768]{0}', space=vmem, size = 0x8000, scoped, tag = 'output window, operand 0']
    %8 = vsyncpa [#allocation4], 0
    %9 = vsyncpa [#allocation7], 0
    %s10 = scalar_lea.sflag [#allocation7], 1
    %11 = vsyncpa %s10, 0
    %12 = vsyncpa [#allocation5], 0
    %s13 = scalar_lea.sflag [#allocation5], 1
    %14 = vsyncpa %s13, 0
    loop: start=0, step=1, limit=5
    $region2: #{tpu_custom_call.1} parent=1 // loop_pre_header
      _
    $region3: #{tpu_custom_call.1} parent=1 // loop_header
      %s16 = sphi 0, %s20
      %p17 = scmp.ge.s32.totalorder %s16, 5
      %s23 = sphi 0, %s49
      %s24 = sphi 0, %s45
      %s25 = sphi 0, %s41
      %s26 = sphi 0, %s37
      %s27 = sphi 0, %s23
      %s28 = sphi 0, %s24
      %s29 = sphi 0, %s25
      %s30 = sphi 0, %s26
      %s31 = sphi 0, %s27
      %s32 = sphi 0, %s28
      %s33 = sphi 0, %s29
      %s34 = sphi 0, %s30
      %s54 = sphi 0, %s56
      %s57 = sphi 0, %s54
      %s58 = sphi 0, %s57
      %s74 = sphi 0, %s58
      %s84 = sphi 0, %s86
      %s87 = sphi 0, %s84
      %s88 = sphi 0, %s87
      %s104 = sphi 0, %s88
      %s112 = sphi 0, %s114
      %s115 = sphi 0, %s112
      %s116 = sphi 0, %s115
      %s132 = sphi 0, %s116
      %s142 = sphi 0, %s144
      %s145 = sphi 0, %s142
      %s146 = sphi 0, %s145
      %s162 = sphi 0, %s146
    $region4: #{tpu_custom_call.1} parent=1 // loop_header_branch
      %19 = sbr.rel (%p17) target = $region8
    $region5: #{tpu_custom_call.1} parent=1 // loop_body
      %s21 = ssub.s32 %s16, 1
      %s22 = ssub.s32 %s16, 2
      %s35 = sadd.s32 1, %s26
      %p36 = scmp.ge.s32.totalorder %s35, 1
      %s37 = scalar_select %p36, 0, %s35
      %s38 = sadd.s32 1, %s25
      %s39 = scalar_select %p36, %s38, %s25
      %p40 = scmp.ge.s32.totalorder %s39, 1
      %s41 = scalar_select %p40, 0, %s39
      %s42 = sadd.s32 1, %s24
      %s43 = scalar_select %p40, %s42, %s24
      %p44 = scmp.ge.s32.totalorder %s43, 1
      %s45 = scalar_select %p44, 0, %s43
      %s46 = sadd.s32 1, %s23
      %s47 = scalar_select %p44, %s46, %s23
      %p48 = scmp.ge.s32.totalorder %s47, 3
      %s49 = scalar_select %p48, 0, %s47
      %s50 = ssub.s32 %s24, %s45
      %s51 = ssub.s32 %s26, %s37
      %s52 = sor.u32 %s50, %s51
      %p53 = scmp.eq.s32.totalorder %s52, 0
      %s55 = sadd.s32 %s54, 1
      %s56 = scalar_select %p53, %s54, %s55
      %p59 = pneg %p53
      %p60 = scmp.eq.s32.totalorder %s16, 2
      %p61 = por %p59, %p60
      %p62 = scmp.ne.s32.totalorder %s54, %s57
      %p63 = scmp.eq.s32.totalorder %s16, 0
      %p64 = por %p62, %p63
      %p65 = scmp.ne.s32.totalorder %s54, %s57
      %p66 = scmp.eq.s32.totalorder %s21, 2
      %p67 = por %p65, %p66
      %p68 = scmp.ne.s32.totalorder %s57, %s58
      %p69 = scmp.eq.s32.totalorder %s21, 0
      %p70 = por %p68, %p69
      %p71 = scmp.ne.s32.totalorder %s57, %s58
      %p72 = scmp.eq.s32.totalorder %s22, 2
      %p73 = por %p71, %p72
      %p75 = scmp.ne.s32.totalorder %s58, %s74
      %p76 = scmp.eq.s32.totalorder %s22, 0
      %p77 = por %p75, %p76
      %s78 = ssub.s32 %s23, %s49
      %s79 = ssub.s32 %s26, %s37
      %s80 = sor.u32 %s78, %s79
      %s81 = ssub.s32 %s25, %s41
      %s82 = sor.u32 %s80, %s81
      %p83 = scmp.eq.s32.totalorder %s82, 0
      %s85 = sadd.s32 %s84, 1
      %s86 = scalar_select %p83, %s84, %s85
      %p89 = pneg %p83
      %p90 = scmp.eq.s32.totalorder %s16, 2
      %p91 = por %p89, %p90
      %p92 = scmp.ne.s32.totalorder %s84, %s87
      %p93 = scmp.eq.s32.totalorder %s16, 0
      %p94 = por %p92, %p93
      %p95 = scmp.ne.s32.totalorder %s84, %s87
      %p96 = scmp.eq.s32.totalorder %s21, 2
      %p97 = por %p95, %p96
      %p98 = scmp.ne.s32.totalorder %s87, %s88
      %p99 = scmp.eq.s32.totalorder %s21, 0
      %p100 = por %p98, %p99
      %p101 = scmp.ne.s32.totalorder %s87, %s88
      %p102 = scmp.eq.s32.totalorder %s22, 2
      %p103 = por %p101, %p102
      %p105 = scmp.ne.s32.totalorder %s88, %s104
      %p106 = scmp.eq.s32.totalorder %s22, 0
      %p107 = por %p105, %p106
      %s108 = ssub.s32 %s23, %s49
      %s109 = ssub.s32 %s25, %s41
      %s110 = sor.u32 %s108, %s109
      %p111 = scmp.eq.s32.totalorder %s110, 0
      %s113 = sadd.s32 %s112, 1
      %s114 = scalar_select %p111, %s112, %s113
      %p117 = pneg %p111
      %p118 = scmp.eq.s32.totalorder %s16, 2
      %p119 = por %p117, %p118
      %p120 = scmp.ne.s32.totalorder %s112, %s115
      %p121 = scmp.eq.s32.totalorder %s16, 0
      %p122 = por %p120, %p121
      %p123 = scmp.ne.s32.totalorder %s112, %s115
      %p124 = scmp.eq.s32.totalorder %s21, 2
      %p125 = por %p123, %p124
      %p126 = scmp.ne.s32.totalorder %s115, %s116
      %p127 = scmp.eq.s32.totalorder %s21, 0
      %p128 = por %p126, %p127
      %p129 = scmp.ne.s32.totalorder %s115, %s116
      %p130 = scmp.eq.s32.totalorder %s22, 2
      %p131 = por %p129, %p130
      %p133 = scmp.ne.s32.totalorder %s116, %s132
      %p134 = scmp.eq.s32.totalorder %s22, 0
      %p135 = por %p133, %p134
      %s136 = ssub.s32 %s23, %s49
      %s137 = ssub.s32 %s24, %s45
      %s138 = sor.u32 %s136, %s137
      %s139 = ssub.s32 %s25, %s41
      %s140 = sor.u32 %s138, %s139
      %p141 = scmp.eq.s32.totalorder %s140, 0
      %s143 = sadd.s32 %s142, 1
      %s144 = scalar_select %p141, %s142, %s143
      %p147 = pneg %p141
      %p148 = scmp.eq.s32.totalorder %s16, 2
      %p149 = por %p147, %p148
      %p150 = scmp.ne.s32.totalorder %s142, %s145
      %p151 = scmp.eq.s32.totalorder %s16, 0
      %p152 = por %p150, %p151
      %p153 = scmp.ne.s32.totalorder %s142, %s145
      %p154 = scmp.eq.s32.totalorder %s21, 2
      %p155 = por %p153, %p154
      %p156 = scmp.ne.s32.totalorder %s145, %s146
      %p157 = scmp.eq.s32.totalorder %s21, 0
      %p158 = por %p156, %p157
      %p159 = scmp.ne.s32.totalorder %s145, %s146
      %p160 = scmp.eq.s32.totalorder %s22, 2
      %p161 = por %p159, %p160
      %p163 = scmp.ne.s32.totalorder %s146, %s162
      %p164 = scmp.eq.s32.totalorder %s22, 0
      %p165 = por %p163, %p164
      %p166 = scmp.le.s32.totalorder 1, %s16
      %p167 = scmp.lt.s32.totalorder %s16, 4
      %p168 = pnand %p166, %p167
      %p169 = pneg %p168
      // Predicated region
      $region9: #{tpu_custom_call.1} parent=5 // pred_check
        _
      $region10: #{tpu_custom_call.1} parent=5 // pred_check_branch
        %171 = sbr.rel (%p168) target = $region12
      $region11: #{tpu_custom_call.1} parent=5 // pred_region
        %s172 = ssub.s32 %s16, 1
        // Predicated region
        $region13: #{tpu_custom_call.1} parent=11 // pred_check
          %p173 = pneg %p70
        $region14: #{tpu_custom_call.1} parent=11 // pred_check_branch
          %175 = sbr.rel (%p173) target = $region16
        $region15: #{tpu_custom_call.1} parent=11 // pred_region
          %s176 = smul.u32 4, %s28
          %s178 = ssub.s32 512, 512
          %179 = vsyncadd [#allocation4], %s178
          %s180 = sadd.s32 %s30, %s176
          %s181 = smul.addr %s180, 128
          %s182 = scalar_lea.hbm %s0, %s181
          %s183 = sshll.u32 [#allocation3], 4
          %s184 = int_to_ptr.vmem [resolvable:$true] %s183
          %189 = dma.hbm_to_vmem [thread:$0]  %s182, 512, %s184, [#allocation4], 128, 128, 8
        $region16: #{tpu_custom_call.1} parent=11 // pred_fallthru
          _
      $region12: #{tpu_custom_call.1} parent=5 // pred_fallthru
        _
      %p190 = scmp.lt.s32.totalorder %s16, 3
      // Predicated region
      $region17: #{tpu_custom_call.1} parent=5 // pred_check
        %p191 = pneg %p190
      $region18: #{tpu_custom_call.1} parent=5 // pred_check_branch
        %193 = sbr.rel (%p191) target = $region20
      $region19: #{tpu_custom_call.1} parent=5 // pred_region
        // Predicated region
        $region21: #{tpu_custom_call.1} parent=19 // pred_check
          %p194 = pneg %p94
        $region22: #{tpu_custom_call.1} parent=19 // pred_check_branch
          %196 = sbr.rel (%p194) target = $region24
        $region23: #{tpu_custom_call.1} parent=19 // pred_region
          %s197 = sand.u32 %s84, 1
          %s198 = scalar_lea.sflag [#allocation7], %s197
          %s199 = sand.u32 %s84, 1
          %s200 = smul.addr %s199, 32
          %s201 = scalar_lea.vmem [#allocation6], %s200
          %s202 = smul.u32 4, %s26
          %s204 = ssub.s32 512, 512
          %205 = vsyncadd %s198, %s204
          %s206 = sadd.s32 %s25, %s202
          %s207 = smul.addr %s23, 4
          %s208 = sadd.s32 %s206, %s207
          %s209 = smul.addr %s208, 128
          %s210 = scalar_lea.hbm %s1, %s209
          %s211 = sshll.u32 %s201, 4
          %s212 = int_to_ptr.vmem [resolvable:$true] %s211
          %217 = dma.hbm_to_vmem [thread:$0]  %s210, 512, %s212, %s198, 128, 128, 8
        $region24: #{tpu_custom_call.1} parent=19 // pred_fallthru
          _
        // Predicated region
        $region25: #{tpu_custom_call.1} parent=19 // pred_check
          %p218 = pneg %p122
        $region26: #{tpu_custom_call.1} parent=19 // pred_check_branch
          %220 = sbr.rel (%p218) target = $region28
        $region27: #{tpu_custom_call.1} parent=19 // pred_region
          %p221 = scmp.lt.s32.totalorder %s23, 2
          %s222 = scalar_select %p221, %s23, 2
          %p223 = scmp.lt.s32.totalorder %s25, 0
          %s224 = scalar_select %p223, %s25, 0
          %s225 = sadd.s32 %s224, %s222
          %s226 = scalar_lea.vmem %s2, %s225
        $region28: #{tpu_custom_call.1} parent=19 // pred_fallthru
          _
      $region20: #{tpu_custom_call.1} parent=5 // pred_fallthru
        _
      %p227 = scmp.le.s32.totalorder 1, %s16
      %p228 = scmp.lt.s32.totalorder %s16, 4
      %p229 = pnand %p227, %p228
      %p230 = pneg %p229
      // Predicated region
      $region29: #{tpu_custom_call.1} parent=5 // pred_check
        _
      $region30: #{tpu_custom_call.1} parent=5 // pred_check_branch
        %232 = sbr.rel (%p229) target = $region32
      $region31: #{tpu_custom_call.1} parent=5 // pred_region
        %s233 = ssub.s32 %s16, 1
        // Predicated region
        $region33: #{tpu_custom_call.1} parent=31 // pred_check
          %p234 = pneg %p70
        $region34: #{tpu_custom_call.1} parent=31 // pred_check_branch
          %236 = sbr.rel (%p234) target = $region36
        $region35: #{tpu_custom_call.1} parent=31 // pred_region
          %237 = dma.done [#allocation4], 512
        $region36: #{tpu_custom_call.1} parent=31 // pred_fallthru
          _
        %s238 = sand.u32 %s87, 1
        %s239 = scalar_lea.sflag [#allocation7], %s238
        %s240 = sand.u32 %s87, 1
        %s241 = smul.addr %s240, 32
        %s242 = scalar_lea.vmem [#allocation6], %s241
        // Predicated region
        $region37: #{tpu_custom_call.1} parent=31 // pred_check
          %p243 = pneg %p100
        $region38: #{tpu_custom_call.1} parent=31 // pred_check_branch
          %245 = sbr.rel (%p243) target = $region40
        $region39: #{tpu_custom_call.1} parent=31 // pred_region
          %246 = dma.done %s239, 512
        $region40: #{tpu_custom_call.1} parent=31 // pred_fallthru
          _
        %p247 = pneg %p70
        %p248 = pneg %p67
        %s249 = sand.u32 %s87, 1
        %s250 = scalar_lea.sflag [#allocation7], %s249
        %s251 = sand.u32 %s87, 1
        %s252 = smul.addr %s251, 32
        %s253 = scalar_lea.vmem [#allocation6], %s252
        %p254 = pneg %p100
        %p255 = pneg %p97
        %p256 = scmp.lt.s32.totalorder %s27, 2
        %s257 = scalar_select %p256, %s27, 2
        %p258 = scmp.lt.s32.totalorder %s29, 0
        %s259 = scalar_select %p258, %s29, 0
        %s260 = sadd.s32 %s259, %s257
        %s261 = scalar_lea.vmem %s2, %s260
        %p262 = pneg %p128
        %p263 = pneg %p125
        %p264 = pneg %p158
        %p265 = pneg %p155
        %s266 = sand.u32 %s145, 1
        %s267 = scalar_lea.sflag [#allocation5], %s266
        %s268 = sand.u32 %s145, 1
        %s269 = smul.addr %s268, 32
        %s270 = scalar_lea.vmem [#allocation8], %s269
        %s271 = smul.u32 4, %s28
        %s272 = smul.u32 4, %s30
        %p273 = scmp.lt.s32.totalorder %s27, 2
        %s274 = scalar_select %p273, %s27, 2
        %p275 = scmp.lt.s32.totalorder %s29, 0
        %s276 = scalar_select %p275, %s29, 0
        %s277 = sadd.s32 %s276, %s274
        %s278 = scalar_lea.vmem %s2, %s277
        %s279 = smul.u32 4, %s28
        %p280 = scmp.eq.s32.totalorder %s30, 0
        // Predicated region
        $region41: #{tpu_custom_call.1} parent=31 // pred_check
          %p281 = pneg %p280
        $region42: #{tpu_custom_call.1} parent=31 // pred_check_branch
          %283 = sbr.rel (%p281) target = $region44
        $region43: #{tpu_custom_call.1} parent=31 // pred_region
          %vm284 = vcmask 261120
          %285 = vst.msk [vmem:[#allocation2] sm:$0xff] %vm284, 0.0
          %286 = vst.msk [vmem:[#allocation2 + $0x8] sm:$0xff] %vm284, 0.0
          %287 = vst.msk [vmem:[#allocation2 + $0x10] sm:$0xff] %vm284, 0.0
          %288 = vst.msk [vmem:[#allocation2 + $0x18] sm:$0xff] %vm284, 0.0
        $region44: #{tpu_custom_call.1} parent=31 // pred_fallthru
          _
        %v289 = vld [vmem:[#allocation2] sm:$0xff]
        %v290 = vld [vmem:[#allocation2 + $0x8] sm:$0xff]
        %v291 = vld [vmem:[#allocation2 + $0x10] sm:$0xff]
        %v292 = vld [vmem:[#allocation2 + $0x18] sm:$0xff]
        %v293 = vld [vmem:[#allocation3] sm:$0xff]
        %v294 = vld [vmem:[#allocation3 + $0x8] sm:$0xff]
        %v295 = vld [vmem:[#allocation3 + $0x10] sm:$0xff]
        %v296 = vld [vmem:[#allocation3 + $0x18] sm:$0xff]
        %v297 = vld [vmem:[%s242] sm:$0xff]
        %v298 = vld [vmem:[%s242 + $0x8] sm:$0xff]
        %v299 = vld [vmem:[%s242 + $0x10] sm:$0xff]
        %v300 = vld [vmem:[%s242 + $0x18] sm:$0xff]
        %vm301 = vcmask 261120
        %v303 = vsel %vm301, %v293, 0
        %v306 = vsel %vm301, %v294, 0
        %v309 = vsel %vm301, %v295, 0
        %v312 = vsel %vm301, %v296, 0
        %314 = vmatprep.subr.mxu0 0.0
        %315 = vmatpush1.msra.mxu0 %v297
        %316 = vmatprep.subr.mxu0 0.0
        %317 = vmatpush1.msra.mxu0 %v298
        %318 = vmatprep.subr.mxu0 0.0
        %319 = vmatpush1.msra.mxu0 %v299
        %320 = vmatprep.subr.mxu0 0.0
        %321 = vmatpush1.msra.mxu0 %v300
        %322 = vmatprep.subr.mxu0 0.0
        %323 = vmatpush1.msra.mxu0 0.0
        %324 = vmatprep.subr.mxu0 0.0
        %325 = vmatpush1.msra.mxu0 0.0
        %326 = vmatprep.subr.mxu0 0.0
        %327 = vmatpush1.msra.mxu0 0.0
        %328 = vmatprep.subr.mxu0 0.0
        %329 = vmatpush1.msra.mxu0 0.0
        %330 = vmatprep.subr.mxu0 0.0
        %331 = vmatpush1.msra.mxu0 0.0
        %332 = vmatprep.subr.mxu0 0.0
        %333 = vmatpush1.msra.mxu0 0.0
        %334 = vmatprep.subr.mxu0 0.0
        %335 = vmatpush1.msra.mxu0 0.0
        %336 = vmatprep.subr.mxu0 0.0
        %337 = vmatpush1.msra.mxu0 0.0
        %338 = vmatprep.subr.mxu0 0.0
        %339 = vmatpush1.msra.mxu0 0.0
        %340 = vmatprep.subr.mxu0 0.0
        %341 = vmatpush1.msra.mxu0 0.0
        %342 = vmatprep.subr.mxu0 0.0
        %343 = vmatpush1.msra.mxu0 0.0
        %344 = vmatprep.subr.mxu0 0.0
        %345 = vmatpush1.msra.mxu0 0.0
        %346 = vmatprep.subr.mxu0 0.0
        %347 = vmatpush1.msra.mxu0 0.0
        %348 = vmatprep.subr.mxu0 0.0
        %349 = vmatpush1.msra.mxu0 0.0
        %350 = vmatprep.subr.mxu0 0.0
        %351 = vmatpush1.msra.mxu0 0.0
        %352 = vmatprep.subr.mxu0 0.0
        %353 = vmatpush1.msra.mxu0 0.0
        %354 = vmatprep.subr.mxu0 0.0
        %355 = vmatpush1.msra.mxu0 0.0
        %356 = vmatprep.subr.mxu0 0.0
        %357 = vmatpush1.msra.mxu0 0.0
        %358 = vmatprep.subr.mxu0 0.0
        %359 = vmatpush1.msra.mxu0 0.0
        %360 = vmatprep.subr.mxu0 0.0
        %361 = vmatpush1.msra.mxu0 0.0
        %362 = vmatprep.subr.mxu0 0.0
        %363 = vmatpush1.msra.mxu0 0.0
        %364 = vmatprep.subr.mxu0 0.0
        %365 = vmatpush1.msra.mxu0 0.0
        %366 = vmatprep.subr.mxu0 0.0
        %367 = vmatpush1.msra.mxu0 0.0
        %368 = vmatprep.subr.mxu0 0.0
        %369 = vmatpush1.msra.mxu0 0.0
        %370 = vmatprep.subr.mxu0 0.0
        %371 = vmatpush1.msra.mxu0 0.0
        %372 = vmatprep.subr.mxu0 0.0
        %373 = vmatpush1.msra.mxu0 0.0
        %374 = vmatprep.subr.mxu0 0.0
        %375 = vmatpush1.msra.mxu0 0.0
        %376 = vmatprep.subr.mxu0 0.0
        %377 = vmatpush1.msra.mxu0 0.0
        %378 = vmatprep.mubr.f32.mxu0 0.0
        %379 = vmatmul.mubr.f32.gmra.mrb[0].mxu0 %v303
        %v380 = vpop.f32.mrb[0].mxu0
        %v381 = vadd.f32 0.0, %v380
        %v382 = vpop.f32.mrb[0].mxu0
        %383 = vmatprep.mubr.f32.mxu0 0.0
        %384 = vmatmul.mubr.f32.gmra.mrb[0].mxu0 %v306
        %v385 = vpop.f32.mrb[0].mxu0
        %v386 = vadd.f32 0.0, %v385
        %v387 = vpop.f32.mrb[0].mxu0
        %388 = vmatprep.mubr.f32.mxu0 0.0
        %389 = vmatmul.mubr.f32.gmra.mrb[0].mxu0 %v309
        %v390 = vpop.f32.mrb[0].mxu0
        %v391 = vadd.f32 0.0, %v390
        %v392 = vpop.f32.mrb[0].mxu0
        %393 = vmatprep.mubr.f32.mxu0 0.0
        %394 = vmatmul.mubr.f32.gmra.mrb[0].mxu0 %v312
        %v395 = vpop.f32.mrb[0].mxu0
        %v396 = vadd.f32 0.0, %v395
        %v397 = vpop.f32.mrb[0].mxu0
        %398 = vdwg.mxu0
        %v399 = vadd.f32 %v289, %v381
        %v400 = vadd.f32 %v290, %v386
        %v401 = vadd.f32 %v291, %v391
        %v402 = vadd.f32 %v292, %v396
        %403 = vst.msk [vmem:[#allocation2] sm:$0xff] %vm301, %v399
        %404 = vst.msk [vmem:[#allocation2 + $0x8] sm:$0xff] %vm301, %v400
        %405 = vst.msk [vmem:[#allocation2 + $0x10] sm:$0xff] %vm301, %v401
        %406 = vst.msk [vmem:[#allocation2 + $0x18] sm:$0xff] %vm301, %v402
        // Predicated region
        $region45: #{tpu_custom_call.1} parent=31 // pred_check
          %p407 = pneg %p280
        $region46: #{tpu_custom_call.1} parent=31 // pred_check_branch
          %409 = sbr.rel (%p407) target = $region48
        $region47: #{tpu_custom_call.1} parent=31 // pred_region
          %v410 = vld [vmem:[#allocation2] sm:$0xff]
          %v411 = vld [vmem:[#allocation2 + $0x8] sm:$0xff]
          %v412 = vld [vmem:[#allocation2 + $0x10] sm:$0xff]
          %v413 = vld [vmem:[#allocation2 + $0x18] sm:$0xff]
          %v414 = vld [vmem:[%s278] sm:$0x1]
          %v416 = vlaneseq
          %v417 = vshrl.u32 %v416, 7
          %v418 = vsub.s32 0, %v417
          %v419 = vrot.slane %v414, %v418
          %v421 = vadd.f32 %v410, %v419
          %v422 = vadd.f32 %v411, %v419
          %v423 = vadd.f32 %v412, %v419
          %v424 = vadd.f32 %v413, %v419
          %425 = vst.msk [vmem:[%s270] sm:$0xff] %vm301, %v421
          %426 = vst.msk [vmem:[%s270 + $0x8] sm:$0xff] %vm301, %v422
          %427 = vst.msk [vmem:[%s270 + $0x10] sm:$0xff] %vm301, %v423
          %428 = vst.msk [vmem:[%s270 + $0x18] sm:$0xff] %vm301, %v424
        $region48: #{tpu_custom_call.1} parent=31 // pred_fallthru
          _
        %s429 = sand.u32 %s145, 1
        %s430 = scalar_lea.sflag [#allocation5], %s429
        %s431 = sand.u32 %s145, 1
        %s432 = smul.addr %s431, 32
        %s433 = scalar_lea.vmem [#allocation8], %s432
        // Predicated region
        $region49: #{tpu_custom_call.1} parent=31 // pred_check
          %p434 = pneg %p155
        $region50: #{tpu_custom_call.1} parent=31 // pred_check_branch
          %436 = sbr.rel (%p434) target = $region52
        $region51: #{tpu_custom_call.1} parent=31 // pred_region
          %s437 = smul.u32 4, %s28
          %s439 = ssub.s32 512, 512
          %440 = vsyncadd %s430, %s439
          %s441 = sadd.s32 %s29, %s437
          %s442 = smul.addr %s27, 4
          %s443 = sadd.s32 %s441, %s442
          %s444 = smul.addr %s443, 128
          %s445 = scalar_lea.hbm %s3, %s444
          %s446 = sshll.u32 %s433, 4
          %s447 = int_to_ptr.vmem [resolvable:$true] %s446
          %452 = dma.vmem_to_hbm [thread:$0]  %s447, 512, %s445, %s430, 128, 128, 8
        $region52: #{tpu_custom_call.1} parent=31 // pred_fallthru
          _
      $region32: #{tpu_custom_call.1} parent=5 // pred_fallthru
        _
      %p453 = scmp.le.s32.totalorder 2, %s16
      // Predicated region
      $region53: #{tpu_custom_call.1} parent=5 // pred_check
        %p454 = pneg %p453
      $region54: #{tpu_custom_call.1} parent=5 // pred_check_branch
        %456 = sbr.rel (%p454) target = $region56
      $region55: #{tpu_custom_call.1} parent=5 // pred_region
        %s457 = ssub.s32 %s16, 2
        // Predicated region
        $region57: #{tpu_custom_call.1} parent=55 // pred_check
          %p458 = pneg %p161
        $region58: #{tpu_custom_call.1} parent=55 // pred_check_branch
          %460 = sbr.rel (%p458) target = $region60
        $region59: #{tpu_custom_call.1} parent=55 // pred_region
          %s461 = sand.u32 %s146, 1
          %s462 = scalar_lea.sflag [#allocation5], %s461
          %s463 = sand.u32 %s146, 1
          %s464 = smul.addr %s463, 32
          %s465 = scalar_lea.vmem [#allocation8], %s464
          %466 = dma.done %s462, 512
        $region60: #{tpu_custom_call.1} parent=55 // pred_fallthru
          _
      $region56: #{tpu_custom_call.1} parent=5 // pred_fallthru
        _
    $region6: #{tpu_custom_call.1} parent=1 // loop_footer
      %s20 = sadd.s32 1, %s16
    $region7: #{tpu_custom_call.1} parent=1 // loop_footer_branch
      %15 = sbr.rel target = $region3
    $region8: #{tpu_custom_call.1} parent=1 // loop_exit
      _
    %467 = vsyncpa [#allocation4], 1
    %s468 = scalar_lea.sflag [#allocation4], 1
    %469 = vsyncpa %s468, 1
    %470 = vsyncpa [#allocation7], 1
    %s471 = scalar_lea.sflag [#allocation7], 1
    %472 = vsyncpa %s471, 1
    %473 = vsyncpa [#allocation5], 1
    %s474 = scalar_lea.sflag [#allocation5], 1
    %475 = vsyncpa %s474, 1

</llo_original>
